<compile_context>
chip_gen: v5e
topology: v5e:2x2
jax: 0.10.0
libtpu: 0.0.40
codegen_flags: <defaults>
</compile_context>

<pallas_src>
import numpy as np
import jax
import jax.numpy as jnp
from jax import lax
from jax.experimental import pallas as pl
from jax.experimental.pallas import tpu as pltpu


# ----------------------------------------------------------------------------
# Host-side setup: sizes + PIL-style bilinear weight matrices
# ----------------------------------------------------------------------------
def _setup_size(size):
    if isinstance(size, int):
        return (size, size)
    if len(size) == 1:
        return (size[0], size[0])
    return (size[0], size[1])


def _pil_bilinear_weights(in_size: int, out_size: int) -> np.ndarray:
    """(out_size, in_size) row-normalized weights matching PIL Image.BILINEAR
    (triangle filter, antialiased when downscaling)."""
    scale = in_size / out_size
    filterscale = max(scale, 1.0)
    support = 1.0 * filterscale  # triangle filter support == 1.0
    W = np.zeros((out_size, in_size), dtype=np.float64)
    for xx in range(out_size):
        center = (xx + 0.5) * scale
        xmin = int(max(center - support + 0.5, 0.0))
        xmax = int(min(center + support + 0.5, float(in_size)))
        if xmax <= xmin:
            continue
        xs = np.arange(xmin, xmax, dtype=np.float64)
        w = np.clip(1.0 - np.abs((xs + 0.5 - center) / filterscale), 0.0, None)
        s = w.sum()
        if s > 0:
            w = w / s
        W[xx, xmin:xmax] = w
    return W.astype(np.float32)


def _resize_plan(H, W, expected_size):
    """Replicates the module's branching exactly (img.size == (W, H))."""
    exp_w, exp_h = _setup_size(expected_size)      # PIL convention: (width, height)
    if W > H:
        new_w = exp_w
        new_h = max(1, int(exp_h * H / W))
    else:
        new_w = max(1, int(exp_w * W / H))
        new_h = exp_h
    pad_w = (exp_w - new_w) // 2
    pad_h = (exp_h - new_h) // 2
    return exp_h, exp_w, new_h, new_w, pad_h, pad_w


def _build_matrices(H, W, exp_h, exp_w, new_h, new_w, pad_h, pad_w, G, compute_dtype):
    """Fully padded resize matrices (padding folded in as zero rows/cols), with the
    height matrix replicated block-diagonally for G-slice batching."""
    rh = np.zeros((exp_h, H), np.float32)
    rh[pad_h:pad_h + new_h, :] = _pil_bilinear_weights(H, new_h)
    rw = np.zeros((exp_w, W), np.float32)
    rw[pad_w:pad_w + new_w, :] = _pil_bilinear_weights(W, new_w)
    if G == 1:
        rh_blk = rh
    else:
        rh_blk = np.zeros((G * exp_h, G * H), np.float32)
        for i in range(G):
            rh_blk[i * exp_h:(i + 1) * exp_h, i * H:(i + 1) * H] = rh
    rwt = np.ascontiguousarray(rw.T)                      # (W, exp_w)
    return jnp.asarray(rh_blk, compute_dtype), jnp.asarray(rwt, compute_dtype)


# ----------------------------------------------------------------------------
# Tiling policy
# ----------------------------------------------------------------------------
def _granule(dtype):
    """Sublane granule of the second-to-last block dim for this dtype."""
    return {4: 8, 2: 16, 1: 32}.get(jnp.dtype(dtype).itemsize, 8)


def _pow2_align(n):
    return n & (-n) if n > 0 else 1


def _vmem_capacity_bytes():
    try:
        info = pltpu.get_tpu_info()
        for name in ("vmem_capacity_bytes", "vmem_bytes", "vmem_size_bytes"):
            cap = getattr(info, name, None)
            if cap:
                return int(cap)
    except Exception:
        pass
    return 64 * 2 ** 20   # conservative fallback (v7x per-TensorCore VMEM)


def _choose_group(bc, H, exp_h, compute_itemsize, gran_in, gran_out,
                  mxu_k=256, mat_budget=2 << 20, row_cap=2048):
    """Largest divisor G of bc batching G slices into one block-diagonal height-pass
    matmul, kept within the MXU contraction width and a matrix-size cap; group
    boundaries that land on sublane granules are preferred."""
    feas = []
    for d in range(1, bc + 1):
        if bc % d:
            continue
        if d > 1 and d * H > mxu_k:          # never pay >1x MXU passes for block-diag zeros
            continue
        if d * exp_h > row_cap:
            continue
        if (d * exp_h) * (d * H) * compute_itemsize > mat_budget:
            continue
        feas.append(d)
    if not feas:
        return 1

    def key(d):
        aligned = int((d * H) % gran_in == 0) + int((d * exp_h) % gran_out == 0)
        return (aligned, d)

    return max(feas, key=key)


def _choose_block(B, H, W, exp_h, exp_w, in_dtype, out_dtype, compute_dtype,
                  width_first, vmem_capacity):
    """Pick BC (channel slices per grid step) and G (slices per height-pass matmul)
    under a generation-aware VMEM budget that includes in-kernel temporaries."""
    in_it = jnp.dtype(in_dtype).itemsize
    out_it = jnp.dtype(out_dtype).itemsize
    ci = jnp.dtype(compute_dtype).itemsize
    gran_in = _granule(in_dtype)
    gran_out = _granule(out_dtype)

    def fits_tiling(bc):
        in_ok = (bc == B) or ((bc * H) % gran_in == 0)
        out_ok = (bc == B) or ((bc * exp_h) % gran_out == 0)
        return in_ok and out_ok

    def footprint(bc, g):
        in_tiles = 2 * bc * H * W * in_it                            # double-buffered input
        out_tiles = 2 * bc * exp_h * exp_w * out_it                  # double-buffered output
        mats = ((g * exp_h) * (g * H) + W * exp_w) * ci              # single-buffered constants
        inter = g * H * exp_w if width_first else g * exp_h * W
        tmp = (g * H * W * ci                                        # compute-dtype cast of xg
               + inter * (4 + ci)                                    # f32 intermediate + cast
               + g * exp_h * exp_w * (4 + out_it))                   # f32 group result + cast
        return in_tiles + out_tiles + mats + tmp

    budget = int(0.55 * vmem_capacity)

    cands = []
    for d in range(1, B + 1):
        if B % d or not fits_tiling(d):
            continue
        g = _choose_group(d, H, exp_h, ci, gran_in, gran_out)
        cands.append((d, g, footprint(d, g)))
    # d == B always passes fits_tiling, so cands is never empty.
    under = [c for c in cands if c[2] <= budget] or [min(cands, key=lambda c: c[2])]

    def pref(c):
        d, _, _ = c
        grid = B // d
        if grid >= 4 and grid % 2 == 0 and d * H >= 512:
            tier = 2          # v7x: >= 2 even steps per TensorCore with still-large tiles
        elif grid >= 2:
            tier = 1
        else:
            tier = 0
        return (tier, d)

    return max(under, key=pref)


# ----------------------------------------------------------------------------
# Pallas kernel
# ----------------------------------------------------------------------------
def _make_kernel(G, H, W, exp_h, exp_w, n_groups, width_first, compute_dtype, out_dtype):
    gH, gE = G * H, G * exp_h
    int_out = jnp.issubdtype(jnp.dtype(out_dtype), jnp.integer)
    if int_out:
        info = jnp.iinfo(out_dtype)
        lo, hi = float(info.min), float(info.max)

    def _finalize(vals_f32):
        if int_out:
            # TODO(synk): PIL quantizes to uint8 after EACH resize pass; this single
            # end-of-pipeline round/clip can differ from true PIL output by ~1 LSB.
            vals_f32 = jnp.clip(jnp.round(vals_f32), lo, hi)
        return vals_f32.astype(out_dtype)

    def kernel(rh_ref, rwt_ref, x_ref, o_ref):
        rh = rh_ref[...]        # (G*exp_h, G*H) block-diagonal; pad rows are zero
        rwt = rwt_ref[...]      # (W, exp_w); pad cols are zero

        def do_group(row_in, row_out):
            xg = x_ref[pl.ds(row_in, gH), :].astype(compute_dtype)          # (G*H, W)
            if width_first:
                t = jnp.dot(xg, rwt, preferred_element_type=jnp.float32)     # (G*H, exp_w)
                og = jnp.dot(rh, t.astype(compute_dtype),
                             preferred_element_type=jnp.float32)             # (G*exp_h, exp_w)
            else:
                t = jnp.dot(rh, xg, preferred_element_type=jnp.float32)      # (G*exp_h, W)
                og = jnp.dot(t.astype(compute_dtype), rwt,
                             preferred_element_type=jnp.float32)             # (G*exp_h, exp_w)
            # Dense, unmasked full-width store (padding folded into rh/rwt).
            o_ref[pl.ds(row_out, gE), :] = _finalize(og)

        if n_groups <= 8:
            for j in range(n_groups):                 # small static unroll, static offsets
                do_group(j * gH, j * gE)
        else:
            in_hint = _pow2_align(gH)
            out_hint = _pow2_align(gE)

            def body(j, carry):
                row_in = j * gH
                row_out = j * gE
                if in_hint > 1:
                    row_in = pl.multiple_of(row_in, in_hint)
                if out_hint > 1:
                    row_out = pl.multiple_of(row_out, out_hint)
                do_group(row_in, row_out)
                return carry

            lax.fori_loop(0, n_groups, body, 0, unroll=2)

    return kernel


# ----------------------------------------------------------------------------
# Wrapper
# ----------------------------------------------------------------------------
def resize_with_padding(x: jax.Array, expected_size, use_bf16_compute=None) -> jax.Array:
    """x: (N, C, H, W). Returns (N, C, exp_h, exp_w): aspect-preserving bilinear resize,
    centered with zero padding (ImageOps.expand semantics)."""
    N, C, H, W = x.shape
    if H == 0 or W == 0:
        # Matches the module's empty-image early return.
        return x

    exp_h, exp_w, new_h, new_w, pad_h, pad_w = _resize_plan(H, W, expected_size)

    in_dtype = x.dtype
    is_float_in = jnp.issubdtype(in_dtype, jnp.floating)
    out_dtype = in_dtype      # floats stay float; uint8 stays uint8 (round+clip in-kernel)
    if use_bf16_compute is None:
        use_bf16 = (in_dtype == jnp.bfloat16) or (not is_float_in)
    else:
        use_bf16 = bool(use_bf16_compute) or (in_dtype == jnp.bfloat16)
    compute_dtype = jnp.bfloat16 if use_bf16 else jnp.float32

    B = N * C
    if B == 0:
        return jnp.zeros((N, C, exp_h, exp_w), out_dtype)

    # Trace-time contraction-order choice from per-slice MXU FLOPs (padded dims).
    cost_wf = H * exp_w * (W + exp_h)
    cost_hf = exp_h * W * (H + exp_w)
    width_first = cost_wf <= cost_hf

    vmem_cap = _vmem_capacity_bytes()
    BC, G, fp = _choose_block(B, H, W, exp_h, exp_w, in_dtype, out_dtype,
                              compute_dtype, width_first, vmem_cap)
    n_groups = BC // G

    vmem_limit = int(min(vmem_cap * 3 // 4, max(32 << 20, 2 * fp)))
    vmem_limit = int(min(vmem_cap, max(vmem_limit, fp + (2 << 20))))

    rh_blk, rwt = _build_matrices(H, W, exp_h, exp_w, new_h, new_w, pad_h, pad_w,
                                  G, compute_dtype)

    x2d = x.reshape(B * H, W)   # free contiguous reshape; native dtype (cast in-kernel)

    kernel = _make_kernel(G, H, W, exp_h, exp_w, n_groups, width_first,
                          compute_dtype, out_dtype)

    in_it = jnp.dtype(in_dtype).itemsize
    out_it = jnp.dtype(out_dtype).itemsize
    ci = jnp.dtype(compute_dtype).itemsize
    cost = pl.CostEstimate(
        flops=2 * B * (cost_wf if width_first else cost_hf),
        transcendentals=0,
        bytes_accessed=(B * H * W * in_it + B * exp_h * exp_w * out_it
                        + ((G * exp_h) * (G * H) + W * exp_w) * ci))

    out2d = pl.pallas_call(
        kernel,
        out_shape=jax.ShapeDtypeStruct((B * exp_h, exp_w), out_dtype),
        grid_spec=pltpu.PrefetchScalarGridSpec(
            num_scalar_prefetch=0,
            grid=(B // BC,),
            in_specs=[
                pl.BlockSpec((G * exp_h, G * H), lambda b: (0, 0),
                             pipeline_mode=pl.Buffered(1)),   # constant matrix, 1 buffer
                pl.BlockSpec((W, exp_w), lambda b: (0, 0),
                             pipeline_mode=pl.Buffered(1)),   # constant matrix, 1 buffer
                pl.BlockSpec((BC * H, W), lambda b: (b, 0)),
            ],
            out_specs=pl.BlockSpec((BC * exp_h, exp_w), lambda b: (b, 0)),
        ),
        compiler_params=pltpu.CompilerParams(
            dimension_semantics=("parallel",),
            vmem_limit_bytes=vmem_limit,
        ),
        cost_estimate=cost,
    )(rh_blk, rwt, x2d)

    return out2d.reshape(N, C, exp_h, exp_w)


# ----------------------------------------------------------------------------
# Demo / self-check
# ----------------------------------------------------------------------------
if __name__ == "__main__":
    key = jax.random.PRNGKey(0)
    # Non-square image so aspect branch, real bilinear resampling and centered zero
    # padding are all exercised: (N=2, C=4, H=16, W=12), expected_size=(16, 24)
    # -> upscale to (H=24, W=12), centered in a 24x16 canvas (2 zero cols each side).
    x = jax.random.uniform(key, (2, 4, 16, 12), dtype=jnp.float32)
    expected_size = (16, 24)   # (width, height), PIL convention

    out = jax.block_until_ready(resize_with_padding(x, expected_size))

    # Pure-JAX reference: padded separable resize matrices, single f32 einsum.
    N, C, H, W = x.shape
    exp_h, exp_w, new_h, new_w, pad_h, pad_w = _resize_plan(H, W, expected_size)
    rh_pad = np.zeros((exp_h, H), np.float32)
    rh_pad[pad_h:pad_h + new_h, :] = _pil_bilinear_weights(H, new_h)
    rw_pad = np.zeros((exp_w, W), np.float32)
    rw_pad[pad_w:pad_w + new_w, :] = _pil_bilinear_weights(W, new_w)
    ref = jnp.einsum("oh,bhw,pw->bop", jnp.asarray(rh_pad),
                     x.reshape(N * C, H, W), jnp.asarray(rw_pad)).reshape(N, C, exp_h, exp_w)

    assert out.shape == (N, C, exp_h, exp_w), out.shape
    assert out.dtype == x.dtype, out.dtype
    err = float(jnp.max(jnp.abs(out - ref)))
    assert err <= 2e-5, err

    # bf16 input path (bf16 MXU compute with f32 accumulation, bf16 output).
    xb = x.astype(jnp.bfloat16)
    out_b = jax.block_until_ready(resize_with_padding(xb, expected_size))
    assert out_b.shape == (N, C, exp_h, exp_w), out_b.shape
    assert out_b.dtype == jnp.bfloat16, out_b.dtype
    err_b = float(jnp.max(jnp.abs(out_b.astype(jnp.float32) - ref)))
    assert err_b <= 3e-2, err_b

    print("KERNEL_OK")
</pallas_src>

<mosaic_0001>
module attributes {stable_mosaic.version = 11 : i64} {
  func.func @kernel(%arg0: i32, %arg1: memref<96x64xf32, #tpu.memory_space<vmem>>, %arg2: memref<12x16xf32, #tpu.memory_space<vmem>>, %arg3: memref<64x12xf32, #tpu.memory_space<vmem>>, %arg4: memref<96x16xf32, #tpu.memory_space<vmem>>) attributes {dimension_semantics = [#tpu.dimension_semantics<parallel>], iteration_bounds = array<i64: 2>, scalar_prefetch = 0 : i64, scratch_operands = 0 : i64, tpu.core_type = #tpu.core_type<tc>, window_params = [{pipeline_mode = #tpu.pipeline_mode<synchronous>, transform_indices = @transform_0, window_bounds = array<i64: 96, 64>}, {pipeline_mode = #tpu.pipeline_mode<synchronous>, transform_indices = @transform_1, window_bounds = array<i64: 12, 16>}, {transform_indices = @transform_2, window_bounds = array<i64: 64, 12>}, {transform_indices = @transform_3, window_bounds = array<i64: 96, 16>}]} {
    %c0 = arith.constant 0 : index
    %c0_0 = arith.constant 0 : index
    %0 = vector.load %arg1[%c0, %c0_0] : memref<96x64xf32, #tpu.memory_space<vmem>>, vector<96x64xf32>
    %c0_1 = arith.constant 0 : index
    %c0_2 = arith.constant 0 : index
    %1 = vector.load %arg2[%c0_1, %c0_2] : memref<12x16xf32, #tpu.memory_space<vmem>>, vector<12x16xf32>
    %c0_3 = arith.constant 0 : index
    %c0_4 = arith.constant 0 : index
    %2 = vector.load %arg3[%c0_3, %c0_4] : memref<64x12xf32, #tpu.memory_space<vmem>>, vector<64x12xf32>
    %cst = arith.constant dense<0.000000e+00> : vector<64x16xf32>
    %3 = tpu.matmul %2, %1, %cst {dimension_numbers = #tpu.dot_dimension_numbers<[1], [0], [0], [1], [0, 0, 1, 1], [], []>} : vector<64x12xf32>, vector<12x16xf32>, vector<64x16xf32> -> vector<64x16xf32>
    %cst_5 = arith.constant dense<0.000000e+00> : vector<96x16xf32>
    %4 = tpu.matmul %0, %3, %cst_5 {dimension_numbers = #tpu.dot_dimension_numbers<[1], [0], [0], [1], [0, 0, 1, 1], [], []>} : vector<96x64xf32>, vector<64x16xf32>, vector<96x16xf32> -> vector<96x16xf32>
    %c0_6 = arith.constant 0 : index
    %c0_7 = arith.constant 0 : index
    %5 = vector.load %arg4[%c0_6, %c0_7] : memref<96x16xf32, #tpu.memory_space<vmem>>, vector<96x16xf32>
    tpu.vector_store %arg4[%c0_6, %c0_7], %4 {strides = array<i32>} : memref<96x16xf32, #tpu.memory_space<vmem>>, vector<96x16xf32>,
    return
  }
  func.func @transform_0(%arg0: i32) -> (i32, i32) {
    %c0_i32 = arith.constant 0 : i32
    %c0_i32_0 = arith.constant 0 : i32
    %c0_i32_1 = arith.constant 0 : i32
    return %c0_i32, %c0_i32_0 : i32, i32
  }
  func.func @transform_1(%arg0: i32) -> (i32, i32) {
    %c0_i32 = arith.constant 0 : i32
    %c0_i32_0 = arith.constant 0 : i32
    %c0_i32_1 = arith.constant 0 : i32
    return %c0_i32, %c0_i32_0 : i32, i32
  }
  func.func @transform_2(%arg0: i32) -> (i32, i32) {
    %c0_i32 = arith.constant 0 : i32
    %c0_i32_0 = arith.constant 0 : i32
    return %arg0, %c0_i32 : i32, i32
  }
  func.func @transform_3(%arg0: i32) -> (i32, i32) {
    %c0_i32 = arith.constant 0 : i32
    %c0_i32_0 = arith.constant 0 : i32
    return %arg0, %c0_i32 : i32, i32
  }
}

</mosaic_0001>

<llo_original>
// kernel: tpu_custom_call.1
$region0: #{tpu_custom_call.1}
  #allocation0 [shape = 'u32[]', space=smem, size = 0x4, offset = 0x4, fixed_abs, tag = 'smem constant byte address 0x4 - core index']
  #allocation1 [shape = 'u32[72,128]{1,0:T(1,128)}', space=vmem, size = 0x9000, scoped, tag = 'internal scratch']
  %s0 = inlined_call_operand.vmem [shape: f32[96,64], index: 0, kind: input, shape index: {}]
  %s1 = inlined_call_operand.vmem [shape: f32[12,16], index: 1, kind: input, shape index: {}]
  %s2 = inlined_call_operand.vmem [shape: f32[128,12], index: 2, kind: input, shape index: {}]
  %s3 = inlined_call_operand.vmem [shape: f32[192,16], index: 3, kind: output, shape index: {}]
  %s4 = sld [smem:[#allocation0]]
  $region45: #{tpu_custom_call.1} parent=0
    _
  %s6 = ssub.s32 1, %s4
  %s7 = scalar_select 0, %s6, %s4
  loop: start=0, step=1, limit=4
  $region2: #{tpu_custom_call.1} parent=0 // loop_pre_header
    _
  $region3: #{tpu_custom_call.1} parent=0 // loop_header
    %s9 = sphi 0, %s13
    %p10 = scmp.ge.s32.totalorder %s9, 4
    %s17 = sphi 0, %s17
    %s19 = sphi 0, %s17
    %s20 = sphi 0, %s19
    %s34 = sphi 0, %s20
    %s38 = sphi 0, %s38
    %s40 = sphi 0, %s38
    %s41 = sphi 0, %s40
    %s55 = sphi 0, %s41
    %s61 = sphi 0, %s63
    %s64 = sphi 0, %s61
    %s65 = sphi 0, %s64
    %s81 = sphi 0, %s65
    %s87 = sphi 0, %s89
    %s90 = sphi 0, %s87
    %s91 = sphi 0, %s90
    %s107 = sphi 0, %s91
  $region4: #{tpu_custom_call.1} parent=0 // loop_header_branch
    %12 = sbr.rel (%p10) target = $region8
  $region5: #{tpu_custom_call.1} parent=0 // loop_body
    %s14 = ssub.s32 %s9, 1
    %s15 = ssub.s32 %s9, 2
    %s16 = sadd.s32 %s9, 1
    %s18 = sadd.s32 %s17, 1
    %p21 = scmp.eq.s32.totalorder %s9, 1
    %p22 = scmp.ne.s32.totalorder %s17, %s19
    %p23 = scmp.eq.s32.totalorder %s9, 0
    %p24 = por %p22, %p23
    %p25 = scmp.ne.s32.totalorder %s17, %s19
    %p26 = scmp.eq.s32.totalorder %s14, 1
    %p27 = por %p25, %p26
    %p28 = scmp.ne.s32.totalorder %s19, %s20
    %p29 = scmp.eq.s32.totalorder %s14, 0
    %p30 = por %p28, %p29
    %p31 = scmp.ne.s32.totalorder %s19, %s20
    %p32 = scmp.eq.s32.totalorder %s15, 1
    %p33 = por %p31, %p32
    %p35 = scmp.ne.s32.totalorder %s20, %s34
    %p36 = scmp.eq.s32.totalorder %s15, 0
    %p37 = por %p35, %p36
    %s39 = sadd.s32 %s38, 1
    %p42 = scmp.eq.s32.totalorder %s9, 1
    %p43 = scmp.ne.s32.totalorder %s38, %s40
    %p44 = scmp.eq.s32.totalorder %s9, 0
    %p45 = por %p43, %p44
    %p46 = scmp.ne.s32.totalorder %s38, %s40
    %p47 = scmp.eq.s32.totalorder %s14, 1
    %p48 = por %p46, %p47
    %p49 = scmp.ne.s32.totalorder %s40, %s41
    %p50 = scmp.eq.s32.totalorder %s14, 0
    %p51 = por %p49, %p50
    %p52 = scmp.ne.s32.totalorder %s40, %s41
    %p53 = scmp.eq.s32.totalorder %s15, 1
    %p54 = por %p52, %p53
    %p56 = scmp.ne.s32.totalorder %s41, %s55
    %p57 = scmp.eq.s32.totalorder %s15, 0
    %p58 = por %p56, %p57
    %s59 = ssub.s32 %s9, %s16
    %p60 = scmp.eq.s32.totalorder %s59, 0
    %s62 = sadd.s32 %s61, 1
    %s63 = scalar_select %p60, %s61, %s62
    %p66 = pneg %p60
    %p67 = scmp.eq.s32.totalorder %s9, 1
    %p68 = por %p66, %p67
    %p69 = scmp.ne.s32.totalorder %s61, %s64
    %p70 = scmp.eq.s32.totalorder %s9, 0
    %p71 = por %p69, %p70
    %p72 = scmp.ne.s32.totalorder %s61, %s64
    %p73 = scmp.eq.s32.totalorder %s14, 1
    %p74 = por %p72, %p73
    %p75 = scmp.ne.s32.totalorder %s64, %s65
    %p76 = scmp.eq.s32.totalorder %s14, 0
    %p77 = por %p75, %p76
    %p78 = scmp.ne.s32.totalorder %s64, %s65
    %p79 = scmp.eq.s32.totalorder %s15, 1
    %p80 = por %p78, %p79
    %p82 = scmp.ne.s32.totalorder %s65, %s81
    %p83 = scmp.eq.s32.totalorder %s15, 0
    %p84 = por %p82, %p83
    %s85 = ssub.s32 %s9, %s16
    %p86 = scmp.eq.s32.totalorder %s85, 0
    %s88 = sadd.s32 %s87, 1
    %s89 = scalar_select %p86, %s87, %s88
    %p92 = pneg %p86
    %p93 = scmp.eq.s32.totalorder %s9, 1
    %p94 = por %p92, %p93
    %p95 = scmp.ne.s32.totalorder %s87, %s90
    %p96 = scmp.eq.s32.totalorder %s9, 0
    %p97 = por %p95, %p96
    %p98 = scmp.ne.s32.totalorder %s87, %s90
    %p99 = scmp.eq.s32.totalorder %s14, 1
    %p100 = por %p98, %p99
    %p101 = scmp.ne.s32.totalorder %s90, %s91
    %p102 = scmp.eq.s32.totalorder %s14, 0
    %p103 = por %p101, %p102
    %p104 = scmp.ne.s32.totalorder %s90, %s91
    %p105 = scmp.eq.s32.totalorder %s15, 1
    %p106 = por %p104, %p105
    %p108 = scmp.ne.s32.totalorder %s91, %s107
    %p109 = scmp.eq.s32.totalorder %s15, 0
    %p110 = por %p108, %p109
    %p111 = scmp.le.s32.totalorder 1, %s9
    %p112 = scmp.lt.s32.totalorder %s9, 3
    %p113 = pnand %p111, %p112
    %p114 = pneg %p113
    // Predicated region
    $region9: #{tpu_custom_call.1} parent=5 // pred_check
      _
    $region10: #{tpu_custom_call.1} parent=5 // pred_check_branch
      %116 = sbr.rel (%p113) target = $region12
    $region11: #{tpu_custom_call.1} parent=5 // pred_region
      %s117 = ssub.s32 %s9, 1
      // Predicated region
      $region13: #{tpu_custom_call.1} parent=11 // pred_check
        %p118 = pneg %p30
      $region14: #{tpu_custom_call.1} parent=11 // pred_check_branch
        %120 = sbr.rel (%p118) target = $region16
      $region15: #{tpu_custom_call.1} parent=11 // pred_region
        _
      $region16: #{tpu_custom_call.1} parent=11 // pred_fallthru
        _
      // Predicated region
      $region17: #{tpu_custom_call.1} parent=11 // pred_check
        %p121 = pneg %p51
      $region18: #{tpu_custom_call.1} parent=11 // pred_check_branch
        %123 = sbr.rel (%p121) target = $region20
      $region19: #{tpu_custom_call.1} parent=11 // pred_region
        _
      $region20: #{tpu_custom_call.1} parent=11 // pred_fallthru
        _
    $region12: #{tpu_custom_call.1} parent=5 // pred_fallthru
      _
    %p124 = scmp.lt.s32.totalorder %s9, 2
    // Predicated region
    $region21: #{tpu_custom_call.1} parent=5 // pred_check
      %p125 = pneg %p124
    $region22: #{tpu_custom_call.1} parent=5 // pred_check_branch
      %127 = sbr.rel (%p125) target = $region24
    $region23: #{tpu_custom_call.1} parent=5 // pred_region
      // Predicated region
      $region25: #{tpu_custom_call.1} parent=23 // pred_check
        %p128 = pneg %p71
      $region26: #{tpu_custom_call.1} parent=23 // pred_check_branch
        %130 = sbr.rel (%p128) target = $region28
      $region27: #{tpu_custom_call.1} parent=23 // pred_region
        %s131 = smul.u32 8, %s9
        %p132 = scmp.lt.s32.totalorder %s131, 15
        %s133 = scalar_select %p132, %s131, 15
        %s134 = smul.addr %s133, 8
        %s135 = scalar_lea.vmem %s2, %s134
        %s136 = smul.u32 8, %s9
      $region28: #{tpu_custom_call.1} parent=23 // pred_fallthru
        _
    $region24: #{tpu_custom_call.1} parent=5 // pred_fallthru
      _
    %p137 = scmp.le.s32.totalorder 1, %s9
    %p138 = scmp.lt.s32.totalorder %s9, 3
    %p139 = pnand %p137, %p138
    %p140 = pneg %p139
    // Predicated region
    $region29: #{tpu_custom_call.1} parent=5 // pred_check
      _
    $region30: #{tpu_custom_call.1} parent=5 // pred_check_branch
      %142 = sbr.rel (%p139) target = $region32
    $region31: #{tpu_custom_call.1} parent=5 // pred_region
      %s143 = ssub.s32 %s9, 1
      %p144 = pneg %p30
      %p145 = pneg %p27
      %p146 = pneg %p51
      %p147 = pneg %p48
      %s148 = smul.u32 8, %s14
      %p149 = scmp.lt.s32.totalorder %s148, 15
      %s150 = scalar_select %p149, %s148, 15
      %s151 = smul.addr %s150, 8
      %s152 = scalar_lea.vmem %s2, %s151
      %p153 = pneg %p77
      %p154 = pneg %p74
      %p155 = pneg %p103
      %p156 = pneg %p100
      %s157 = smul.u32 12, %s14
      %p158 = scmp.lt.s32.totalorder %s157, 23
      %s159 = scalar_select %p158, %s157, 23
      %s160 = smul.addr %s159, 8
      %s161 = scalar_lea.vmem %s3, %s160
      %s162 = smul.u32 8, %s14
      %p163 = scmp.lt.s32.totalorder %s162, 15
      %s164 = scalar_select %p163, %s162, 15
      %s165 = smul.addr %s164, 8
      %s166 = scalar_lea.vmem %s2, %s165
      %s167 = smul.u32 8, %s14
      %s168 = smul.u32 12, %s14
      %p169 = scmp.lt.s32.totalorder %s168, 23
      %s170 = scalar_select %p169, %s168, 23
      %s171 = smul.addr %s170, 8
      %s172 = scalar_lea.vmem %s3, %s171
      %s173 = smul.u32 12, %s14
      %v174 = vld [vmem:[%s0] sm:$0xff]
      %v175 = vld [vmem:[%s0 + $0x8] sm:$0xff]
      %v176 = vld [vmem:[%s0 + $0x10] sm:$0xff]
      %v177 = vld [vmem:[%s0 + $0x18] sm:$0xff]
      %v178 = vld [vmem:[%s0 + $0x20] sm:$0xff]
      %v179 = vld [vmem:[%s0 + $0x28] sm:$0xff]
      %v180 = vld [vmem:[%s0 + $0x30] sm:$0xff]
      %v181 = vld [vmem:[%s0 + $0x38] sm:$0xff]
      %v182 = vld [vmem:[%s0 + $0x40] sm:$0xff]
      %v183 = vld [vmem:[%s0 + $0x48] sm:$0xff]
      %v184 = vld [vmem:[%s0 + $0x50] sm:$0xff]
      %v185 = vld [vmem:[%s0 + $0x58] sm:$0xff]
      %v186 = vld [vmem:[%s1] sm:$0xff]
      %v187 = vld [vmem:[%s1 + $0x8] sm:$0xf]
      %v188 = vld [vmem:[%s166] sm:$0xff]
      %v189 = vld [vmem:[%s166 + $0x8] sm:$0xff]
      %v190 = vld [vmem:[%s166 + $0x10] sm:$0xff]
      %v191 = vld [vmem:[%s166 + $0x18] sm:$0xff]
      %v192 = vld [vmem:[%s166 + $0x20] sm:$0xff]
      %v193 = vld [vmem:[%s166 + $0x28] sm:$0xff]
      %v194 = vld [vmem:[%s166 + $0x30] sm:$0xff]
      %v195 = vld [vmem:[%s166 + $0x38] sm:$0xff]
      %vm196 = vcmask 97280
      %v198 = vsel %vm196, %v188, 0
      %v201 = vsel %vm196, %v189, 0
      %v204 = vsel %vm196, %v190, 0
      %v207 = vsel %vm196, %v191, 0
      %v210 = vsel %vm196, %v192, 0
      %v213 = vsel %vm196, %v193, 0
      %v216 = vsel %vm196, %v194, 0
      %v219 = vsel %vm196, %v195, 0
      %vm221 = vcmask 1043456
      %v223 = vsel %vm221, %v187, 0
      %225 = vmatpush.msra.mxu0 0.0
      %226 = vmatpush.msra.mxu0 0.0
      %227 = vmatpush.msra.mxu0 0.0
      %228 = vmatpush.msra.mxu0 0.0
      %229 = vmatpush.msra.mxu0 0.0
      %230 = vmatpush.msra.mxu0 0.0
      %231 = vmatpush.msra.mxu0 0.0
      %232 = vmatpush.msra.mxu0 0.0
      %233 = vmatpush.msra.mxu0 0.0
      %234 = vmatpush.msra.mxu0 0.0
      %235 = vmatpush.msra.mxu0 0.0
      %236 = vmatpush.msra.mxu0 0.0
      %237 = vmatpush.msra.mxu0 0.0
      %238 = vmatpush.msra.mxu0 0.0
      %239 = vmatpush.msra.mxu0 %v223
      %240 = vmatpush.msra.mxu0 %v186
      %241 = vmatmul.f32.gmra.mxu0 %v198
      %v242 = vpop.f32.mrf.mxu0
      %v243 = vadd.f32 0.0, %v242
      %244 = vmatmul.f32.gmra.mxu0 %v201
      %v245 = vpop.f32.mrf.mxu0
      %v246 = vadd.f32 0.0, %v245
      %247 = vmatmul.f32.gmra.mxu0 %v204
      %v248 = vpop.f32.mrf.mxu0
      %v249 = vadd.f32 0.0, %v248
      %250 = vmatmul.f32.gmra.mxu0 %v207
      %v251 = vpop.f32.mrf.mxu0
      %v252 = vadd.f32 0.0, %v251
      %253 = vmatmul.f32.gmra.mxu0 %v210
      %v254 = vpop.f32.mrf.mxu0
      %v255 = vadd.f32 0.0, %v254
      %256 = vmatmul.f32.gmra.mxu0 %v213
      %v257 = vpop.f32.mrf.mxu0
      %v258 = vadd.f32 0.0, %v257
      %259 = vmatmul.f32.gmra.mxu0 %v216
      %v260 = vpop.f32.mrf.mxu0
      %v261 = vadd.f32 0.0, %v260
      %262 = vmatmul.f32.gmra.mxu0 %v219
      %v263 = vpop.f32.mrf.mxu0
      %v264 = vadd.f32 0.0, %v263
      %265 = vdwg.mxu0
      %vm266 = vcmask 523264
      %v268 = vsel %vm266, %v174, 0
      %v271 = vsel %vm266, %v175, 0
      %v274 = vsel %vm266, %v176, 0
      %v277 = vsel %vm266, %v177, 0
      %v280 = vsel %vm266, %v178, 0
      %v283 = vsel %vm266, %v179, 0
      %v286 = vsel %vm266, %v180, 0
      %v289 = vsel %vm266, %v181, 0
      %v292 = vsel %vm266, %v182, 0
      %v295 = vsel %vm266, %v183, 0
      %v298 = vsel %vm266, %v184, 0
      %v301 = vsel %vm266, %v185, 0
      %303 = vmatpush.msra.mxu0 0.0
      %304 = vmatpush.msra.mxu0 0.0
      %305 = vmatpush.msra.mxu0 0.0
      %306 = vmatpush.msra.mxu0 0.0
      %307 = vmatpush.msra.mxu0 0.0
      %308 = vmatpush.msra.mxu0 0.0
      %309 = vmatpush.msra.mxu0 0.0
      %310 = vmatpush.msra.mxu0 0.0
      %311 = vmatpush.msra.mxu0 %v264
      %312 = vmatpush.msra.mxu0 %v261
      %313 = vmatpush.msra.mxu0 %v258
      %314 = vmatpush.msra.mxu0 %v255
      %315 = vmatpush.msra.mxu0 %v252
      %316 = vmatpush.msra.mxu0 %v249
      %317 = vmatpush.msra.mxu0 %v246
      %318 = vmatpush.msra.mxu0 %v243
      %319 = vmatmul.f32.gmra.mxu0 %v268
      %v320 = vpop.f32.mrf.mxu0
      %v321 = vadd.f32 0.0, %v320
      %322 = vmatmul.f32.gmra.mxu0 %v271
      %v323 = vpop.f32.mrf.mxu0
      %v324 = vadd.f32 0.0, %v323
      %325 = vmatmul.f32.gmra.mxu0 %v274
      %v326 = vpop.f32.mrf.mxu0
      %v327 = vadd.f32 0.0, %v326
      %328 = vmatmul.f32.gmra.mxu0 %v277
      %v329 = vpop.f32.mrf.mxu0
      %v330 = vadd.f32 0.0, %v329
      %331 = vmatmul.f32.gmra.mxu0 %v280
      %v332 = vpop.f32.mrf.mxu0
      %v333 = vadd.f32 0.0, %v332
      %334 = vmatmul.f32.gmra.mxu0 %v283
      %v335 = vpop.f32.mrf.mxu0
      %v336 = vadd.f32 0.0, %v335
      %337 = vmatmul.f32.gmra.mxu0 %v286
      %v338 = vpop.f32.mrf.mxu0
      %v339 = vadd.f32 0.0, %v338
      %340 = vmatmul.f32.gmra.mxu0 %v289
      %v341 = vpop.f32.mrf.mxu0
      %v342 = vadd.f32 0.0, %v341
      %343 = vmatmul.f32.gmra.mxu0 %v292
      %v344 = vpop.f32.mrf.mxu0
      %v345 = vadd.f32 0.0, %v344
      %346 = vmatmul.f32.gmra.mxu0 %v295
      %v347 = vpop.f32.mrf.mxu0
      %v348 = vadd.f32 0.0, %v347
      %349 = vmatmul.f32.gmra.mxu0 %v298
      %v350 = vpop.f32.mrf.mxu0
      %v351 = vadd.f32 0.0, %v350
      %352 = vmatmul.f32.gmra.mxu0 %v301
      %v353 = vpop.f32.mrf.mxu0
      %v354 = vadd.f32 0.0, %v353
      %355 = vdwg.mxu0
      %vm356 = vcmask 130048
      %357 = vst.msk [vmem:[%s172] sm:$0xff] %vm356, %v321
      %358 = vst.msk [vmem:[%s172 + $0x8] sm:$0xff] %vm356, %v324
      %359 = vst.msk [vmem:[%s172 + $0x10] sm:$0xff] %vm356, %v327
      %360 = vst.msk [vmem:[%s172 + $0x18] sm:$0xff] %vm356, %v330
      %361 = vst.msk [vmem:[%s172 + $0x20] sm:$0xff] %vm356, %v333
      %362 = vst.msk [vmem:[%s172 + $0x28] sm:$0xff] %vm356, %v336
      %363 = vst.msk [vmem:[%s172 + $0x30] sm:$0xff] %vm356, %v339
      %364 = vst.msk [vmem:[%s172 + $0x38] sm:$0xff] %vm356, %v342
      %365 = vst.msk [vmem:[%s172 + $0x40] sm:$0xff] %vm356, %v345
      %366 = vst.msk [vmem:[%s172 + $0x48] sm:$0xff] %vm356, %v348
      %367 = vst.msk [vmem:[%s172 + $0x50] sm:$0xff] %vm356, %v351
      %368 = vst.msk [vmem:[%s172 + $0x58] sm:$0xff] %vm356, %v354
      %s369 = smul.u32 12, %s14
      %p370 = scmp.lt.s32.totalorder %s369, 23
      %s371 = scalar_select %p370, %s369, 23
      %s372 = smul.addr %s371, 8
      %s373 = scalar_lea.vmem %s3, %s372
      // Predicated region
      $region33: #{tpu_custom_call.1} parent=31 // pred_check
        %p374 = pneg %p100
      $region34: #{tpu_custom_call.1} parent=31 // pred_check_branch
        %376 = sbr.rel (%p374) target = $region36
      $region35: #{tpu_custom_call.1} parent=31 // pred_region
        %s377 = smul.u32 12, %s14
      $region36: #{tpu_custom_call.1} parent=31 // pred_fallthru
        _
    $region32: #{tpu_custom_call.1} parent=5 // pred_fallthru
      _
    %p378 = scmp.le.s32.totalorder 2, %s9
    // Predicated region
    $region37: #{tpu_custom_call.1} parent=5 // pred_check
      %p379 = pneg %p378
    $region38: #{tpu_custom_call.1} parent=5 // pred_check_branch
      %381 = sbr.rel (%p379) target = $region40
    $region39: #{tpu_custom_call.1} parent=5 // pred_region
      %s382 = ssub.s32 %s9, 2
      // Predicated region
      $region41: #{tpu_custom_call.1} parent=39 // pred_check
        %p383 = pneg %p106
      $region42: #{tpu_custom_call.1} parent=39 // pred_check_branch
        %385 = sbr.rel (%p383) target = $region44
      $region43: #{tpu_custom_call.1} parent=39 // pred_region
        %s386 = smul.u32 12, %s15
        %p387 = scmp.lt.s32.totalorder %s386, 23
        %s388 = scalar_select %p387, %s386, 23
        %s389 = smul.addr %s388, 8
        %s390 = scalar_lea.vmem %s3, %s389
      $region44: #{tpu_custom_call.1} parent=39 // pred_fallthru
        _
    $region40: #{tpu_custom_call.1} parent=5 // pred_fallthru
      _
  $region6: #{tpu_custom_call.1} parent=0 // loop_footer
    %s13 = sadd.s32 1, %s9
  $region7: #{tpu_custom_call.1} parent=0 // loop_footer_branch
    %8 = sbr.rel target = $region3
  $region8: #{tpu_custom_call.1} parent=0 // loop_exit
    _

</llo_original>
